<compile_context>
chip_gen: v5e
topology: v5e:2x2
jax: 0.10.0
libtpu: 0.0.40
codegen_flags: <defaults>
</compile_context>

<pallas_src>
import math
import functools

import jax
import jax.numpy as jnp
from jax import lax
from jax.experimental import pallas as pl
from jax.experimental.pallas import tpu as pltpu

_BN_EPS = 1e-5


def _round_up(x, m):
    return (x + m - 1) // m * m


def _pick_col_tile(cols_pad, k_pad, elem_bytes, budget_bytes):
    """Lane-dense (multiple of 128) tile along the streamed output dim, sized so
    one weight tile stays within `budget_bytes` (it is double-buffered)."""
    t = max(128, (budget_bytes // max(k_pad * elem_bytes, 1)) // 128 * 128)
    return min(t, cols_pad)


# --------------------------------------------------------------------------
# Kernel 1: fused per-feature Linears + concat + BatchNorm1d(input_dim)
#           (block-diagonal weight with BN folded in, built by the wrapper)
# --------------------------------------------------------------------------
def _affine_proj_kernel(x_ref, w_ref, b_ref, out_ref):
    # x   : (B, Tin_pad)        f32  (resident across grid steps)
    # w   : (TILE_D, Tin_pad)   f32  (streamed per tile)
    # b   : (1, TILE_D)         f32
    # out : (B, TILE_D)         f32
    z = lax.dot_general(
        x_ref[...], w_ref[...],
        dimension_numbers=(((1,), (1,)), ((), ())),
        preferred_element_type=jnp.float32)
    out_ref[...] = z + b_ref[...]


# --------------------------------------------------------------------------
# Kernel 2: body Linear(input_dim, hidden) + SiLU + BatchNorm1d(hidden)
# --------------------------------------------------------------------------
def _body_kernel(z_ref, w_ref, b_ref, scale_ref, shift_ref, out_ref):
    # z     : (B, Din_pad)        f32  (resident)
    # w     : (TILE_H, Din_pad)   f32  (streamed per tile)
    # b/scale/shift : (1, TILE_H) f32  (BN2 folded to scale/shift in wrapper)
    # out   : (B, TILE_H)         f32
    h = lax.dot_general(
        z_ref[...], w_ref[...],
        dimension_numbers=(((1,), (1,)), ((), ())),
        preferred_element_type=jnp.float32)
    h = h + b_ref[...]
    h = h * (1.0 / (1.0 + jnp.exp(-h)))          # SiLU: exp on EUP, mul on VPU
    out_ref[...] = h * scale_ref[...] + shift_ref[...]


# --------------------------------------------------------------------------
# Kernel 3: ArcMarginProduct head
# --------------------------------------------------------------------------
def _arc_margin_kernel(x_ref, wn_ref, label_ref, out_ref, *,
                       s, cos_m, sin_m, th, mm, easy_margin, ls_eps, num_classes):
    # x_ref     : (B, Dp)       f32  (full array, resident across grid steps)
    # wn_ref    : (TILE_C, Dp)  bf16 (pre-normalized weight tile, streamed)
    # label_ref : (B, 1)        i32
    # out_ref   : (B, TILE_C)   f32
    x = x_ref[...]
    # F.normalize(x, dim=1) == x * rsqrt(max(sum(x^2), eps^2))  (EUP rsqrt)
    sumsq = jnp.sum(x * x, axis=-1, keepdims=True)
    x_n = x * lax.rsqrt(jnp.maximum(sumsq, 1e-24))

    # cosine = x_n @ w_n^T : contract last dims directly (no XLU transpose),
    # bf16 operands feed the MXU, accumulate in f32.
    cosine = lax.dot_general(
        x_n.astype(jnp.bfloat16), wn_ref[...],
        dimension_numbers=(((1,), (1,)), ((), ())),
        preferred_element_type=jnp.float32)                    # (B, TILE_C)

    # Clamp before sqrt: |cosine| can exceed 1 by a ULP after the matmul.
    sine = jnp.sqrt(jnp.maximum(1.0 - cosine * cosine, 0.0))
    phi = cosine * cos_m - sine * sin_m
    if easy_margin:
        phi = jnp.where(cosine > 0.0, phi, cosine)
    else:
        phi = jnp.where(cosine > th, phi, cosine - mm)

    # Global class index of each column in this tile.
    tile_c = out_ref.shape[1]
    col_base = pl.program_id(0) * tile_c
    col_ids = col_base + lax.broadcasted_iota(jnp.int32, cosine.shape, 1)
    labels = label_ref[...]                                    # (B, 1) int32
    match = col_ids == labels

    if ls_eps > 0.0:
        hot = 1.0 - ls_eps + ls_eps / num_classes
        cold = ls_eps / num_classes
        one_hot = jnp.where(match, hot, cold)
        out = (one_hot * phi + (1.0 - one_hot) * cosine) * s
    else:
        out = jnp.where(match, phi, cosine) * s                # single select
    out_ref[...] = out.astype(out_ref.dtype)


class ArcMarginProductPallas:
    """JAX/Pallas port of the PyTorch ArcMarginProduct module (forward only)."""

    def __init__(self, in_features, out_features, s=30.0, m=0.5,
                 easy_margin=False, ls_eps=0.0, key=None):
        self.in_features = in_features
        self.out_features = out_features
        self.s = float(s)
        self.m = float(m)
        self.easy_margin = bool(easy_margin)
        self.ls_eps = float(ls_eps)
        self.cos_m = math.cos(m)
        self.sin_m = math.sin(m)
        self.th = math.cos(math.pi - m)
        self.mm = math.sin(math.pi - m) * m

        if key is None:
            key = jax.random.PRNGKey(0)
        # xavier_uniform_: U(-a, a), a = sqrt(6/(fan_in+fan_out))
        bound = math.sqrt(6.0 / (in_features + out_features))
        self.weight = jax.random.uniform(
            key, (out_features, in_features), jnp.float32, -bound, bound)

    def __call__(self, x, label):
        B = x.shape[0]
        D = self.in_features
        C = self.out_features

        # --- padded / lane-dense geometry --------------------------------
        d_pad = _round_up(D, 128)
        # ~2 MiB bf16 weight tile (double-buffered -> ~4 MiB), multiple of 128.
        tile_c = _pick_col_tile(_round_up(C, 128), d_pad, 2, 2 * 1024 * 1024)
        c_pad = _round_up(C, tile_c)

        # --- hoisted, once-per-call weight normalization; stream as bf16 --
        w = self.weight
        w_inv = lax.rsqrt(jnp.maximum(jnp.sum(w * w, axis=-1, keepdims=True), 1e-24))
        w_n = (w * w_inv).astype(jnp.bfloat16)
        w_n = jnp.pad(w_n, ((0, c_pad - C), (0, d_pad - D)))

        x_p = jnp.pad(x.astype(jnp.float32), ((0, 0), (0, d_pad - D)))
        label2d = label.reshape(B, 1).astype(jnp.int32)

        kernel = functools.partial(
            _arc_margin_kernel,
            s=self.s, cos_m=self.cos_m, sin_m=self.sin_m,
            th=self.th, mm=self.mm,
            easy_margin=self.easy_margin, ls_eps=self.ls_eps,
            num_classes=self.out_features)

        out = pl.pallas_call(
            kernel,
            out_shape=jax.ShapeDtypeStruct((B, c_pad), jnp.float32),
            grid=(c_pad // tile_c,),
            in_specs=[
                pl.BlockSpec((B, d_pad), lambda j: (0, 0)),        # x: resident
                pl.BlockSpec((tile_c, d_pad), lambda j: (j, 0)),   # W: streamed
                pl.BlockSpec((B, 1), lambda j: (0, 0)),            # labels
            ],
            out_specs=pl.BlockSpec((B, tile_c), lambda j: (0, j)),
            compiler_params=pltpu.CompilerParams(
                dimension_semantics=("parallel",),
                vmem_limit_bytes=32 * 1024 * 1024),
        )(x_p, w_n, label2d)

        return out[:, :C]


class MLPPallas:
    """JAX/Pallas port of the PyTorch MLP forward (inference semantics)."""

    def __init__(self, config, key=None):
        m = config["model"]
        self.features_mapping = dict(m["features_mapping"])
        self.concat_features = list(m["concat_features"])
        self.input_dim = int(m["input_dim"])
        self.hidden_dim = int(m["hidden_dim"])       # spec hard-codes BatchNorm1d(1024)
        self.embedding_size = int(m["embedding_size"])
        self.num_classes = int(m["num_classes"])
        assert self.embedding_size == self.hidden_dim, \
            "body output (hidden_dim) feeds the ArcFace head (embedding_size)"

        if key is None:
            key = jax.random.PRNGKey(0)
        keys = iter(jax.random.split(key, 2 * len(self.features_mapping) + 16))

        # per-feature Linear params (PyTorch default: U(-1/sqrt(fan_in), +))
        self.feat_params = {}
        for name, (fin, fout) in self.features_mapping.items():
            bound = 1.0 / math.sqrt(fin)
            W = jax.random.uniform(next(keys), (fout, fin), jnp.float32, -bound, bound)
            b = jax.random.uniform(next(keys), (fout,), jnp.float32, -bound, bound)
            self.feat_params[name] = (W, b)

        # BatchNorm1d(input_dim): (gamma, beta, running_mean, running_var)
        d = self.input_dim
        self.bn1 = (jax.random.uniform(next(keys), (d,), jnp.float32, 0.5, 1.5),
                    0.1 * jax.random.normal(next(keys), (d,), jnp.float32),
                    0.1 * jax.random.normal(next(keys), (d,), jnp.float32),
                    jax.random.uniform(next(keys), (d,), jnp.float32, 0.5, 1.5))

        # body Linear(input_dim, hidden_dim)
        bound = 1.0 / math.sqrt(self.input_dim)
        self.body_linear = (
            jax.random.uniform(next(keys), (self.hidden_dim, self.input_dim),
                               jnp.float32, -bound, bound),
            jax.random.uniform(next(keys), (self.hidden_dim,),
                               jnp.float32, -bound, bound))

        # BatchNorm1d(hidden_dim)
        h = self.hidden_dim
        self.bn2 = (jax.random.uniform(next(keys), (h,), jnp.float32, 0.5, 1.5),
                    0.1 * jax.random.normal(next(keys), (h,), jnp.float32),
                    0.1 * jax.random.normal(next(keys), (h,), jnp.float32),
                    jax.random.uniform(next(keys), (h,), jnp.float32, 0.5, 1.5))

        # ArcFace head (s=30.0, m=0.3, easy_margin=False, ls_eps=0.0 per MLP)
        self.arcface = ArcMarginProductPallas(
            self.embedding_size, self.num_classes, s=30.0, m=0.3,
            easy_margin=False, ls_eps=0.0, key=next(keys))

        # TODO(synk): nn.Dropout(0.15)/(0.45) and train-mode BatchNorm batch
        # statistics are not implemented; forward uses inference semantics
        # (dropout = identity, BN = running stats folded into the linears).

    # ---------------------------------------------------------------------
    def __call__(self, batch, targets=None):
        # ---- stage 1: feature Linears + concat + BN1 as ONE affine map ----
        xs, blocks, biases = [], [], []
        for name in self.concat_features:
            x_f = batch[name].astype(jnp.float32)
            xs.append(x_f)
            if name in self.feat_params:
                W, b = self.feat_params[name]
            else:  # un-mapped feature passes through the concat untouched
                W = jnp.eye(x_f.shape[1], dtype=jnp.float32)
                b = jnp.zeros((x_f.shape[1],), jnp.float32)
            blocks.append(W)
            biases.append(b)

        x_cat = jnp.concatenate(xs, axis=1)
        B = x_cat.shape[0]
        total_in = x_cat.shape[1]
        total_out = sum(int(W.shape[0]) for W in blocks)
        assert total_out == self.input_dim

        # block-diagonal fused weight (built once per call; tiny wrapper work)
        W_bd = jnp.zeros((total_out, total_in), jnp.float32)
        r = c = 0
        for W, b in zip(blocks, biases):
            fo, fi = W.shape
            W_bd = W_bd.at[r:r + fo, c:c + fi].set(W)
            r += fo
            c += fi
        b_bd = jnp.concatenate(biases)

        # fold eval-mode BN1 into the affine map: BN(y) = y*s1 + (beta - mean*s1)
        g1, be1, m1, v1 = self.bn1
        s1 = g1 * lax.rsqrt(v1 + _BN_EPS)
        Wf = W_bd * s1[:, None]
        bf = (b_bd - m1) * s1 + be1

        tin_pad = _round_up(total_in, 128)
        tile_d = _pick_col_tile(_round_up(total_out, 128), tin_pad, 4, 4 * 1024 * 1024)
        din_pad = _round_up(total_out, tile_d)

        x_p = jnp.pad(x_cat, ((0, 0), (0, tin_pad - total_in)))
        Wf_p = jnp.pad(Wf, ((0, din_pad - total_out), (0, tin_pad - total_in)))
        bf_p = jnp.pad(bf, (0, din_pad - total_out)).reshape(1, din_pad)

        z = pl.pallas_call(
            _affine_proj_kernel,
            out_shape=jax.ShapeDtypeStruct((B, din_pad), jnp.float32),
            grid=(din_pad // tile_d,),
            in_specs=[
                pl.BlockSpec((B, tin_pad), lambda j: (0, 0)),        # x: resident
                pl.BlockSpec((tile_d, tin_pad), lambda j: (j, 0)),   # W: streamed
                pl.BlockSpec((1, tile_d), lambda j: (0, j)),
            ],
            out_specs=pl.BlockSpec((B, tile_d), lambda j: (0, j)),
            compiler_params=pltpu.CompilerParams(
                dimension_semantics=("parallel",),
                vmem_limit_bytes=32 * 1024 * 1024),
        )(x_p, Wf_p, bf_p)

        # ---- stage 2: fused Linear -> SiLU -> BN2 (body) -------------------
        W_body, b_body = self.body_linear
        g2, be2, m2, v2 = self.bn2
        s2 = g2 * lax.rsqrt(v2 + _BN_EPS)
        sh2 = be2 - m2 * s2

        h_dim = self.hidden_dim
        tile_h = _pick_col_tile(_round_up(h_dim, 128), din_pad, 4, 4 * 1024 * 1024)
        h_pad = _round_up(h_dim, tile_h)

        Wb_p = jnp.pad(W_body, ((0, h_pad - h_dim), (0, din_pad - total_out)))
        bb_p = jnp.pad(b_body, (0, h_pad - h_dim)).reshape(1, h_pad)
        s2_p = jnp.pad(s2, (0, h_pad - h_dim)).reshape(1, h_pad)
        sh2_p = jnp.pad(sh2, (0, h_pad - h_dim)).reshape(1, h_pad)

        emb_pad = pl.pallas_call(
            _body_kernel,
            out_shape=jax.ShapeDtypeStruct((B, h_pad), jnp.float32),
            grid=(h_pad // tile_h,),
            in_specs=[
                pl.BlockSpec((B, din_pad), lambda j: (0, 0)),        # z: resident
                pl.BlockSpec((tile_h, din_pad), lambda j: (j, 0)),   # W: streamed
                pl.BlockSpec((1, tile_h), lambda j: (0, j)),
                pl.BlockSpec((1, tile_h), lambda j: (0, j)),
                pl.BlockSpec((1, tile_h), lambda j: (0, j)),
            ],
            out_specs=pl.BlockSpec((B, tile_h), lambda j: (0, j)),
            compiler_params=pltpu.CompilerParams(
                dimension_semantics=("parallel",),
                vmem_limit_bytes=32 * 1024 * 1024),
        )(z, Wb_p, bb_p, s2_p, sh2_p)

        emb = emb_pad[:, :h_dim]

        if targets is None:
            return emb

        # ---- stage 3: (end dropout = identity) + ArcFace head -------------
        out = self.arcface(emb, targets)
        return emb, out


# --------------------------------------------------------------------------
# Pure-JAX references (sanity checks)
# --------------------------------------------------------------------------
def _arc_reference(x, weight, label, *, s, cos_m, sin_m, th, mm,
                   easy_margin, ls_eps, C):
    x_n = x / jnp.maximum(jnp.linalg.norm(x, axis=-1, keepdims=True), 1e-12)
    w_n = weight / jnp.maximum(jnp.linalg.norm(weight, axis=-1, keepdims=True), 1e-12)
    cosine = x_n @ w_n.T
    sine = jnp.sqrt(jnp.clip(1.0 - cosine * cosine, 0.0, 1.0))
    phi = cosine * cos_m - sine * sin_m
    phi = jnp.where(cosine > 0.0, phi, cosine) if easy_margin else \
        jnp.where(cosine > th, phi, cosine - mm)
    one_hot = jax.nn.one_hot(label, C, dtype=jnp.float32)
    if ls_eps > 0:
        one_hot = (1.0 - ls_eps) * one_hot + ls_eps / C
    return (one_hot * phi + (1.0 - one_hot) * cosine) * s


def _mlp_reference(model, batch, label):
    feats = []
    for name in model.concat_features:
        x_f = batch[name].astype(jnp.float32)
        if name in model.feat_params:
            W, b = model.feat_params[name]
            x_f = x_f @ W.T + b
        feats.append(x_f)
    x = jnp.concatenate(feats, axis=1)
    g1, be1, m1, v1 = model.bn1
    x = (x - m1) * lax.rsqrt(v1 + _BN_EPS) * g1 + be1
    W, b = model.body_linear
    h = x @ W.T + b
    h = h * (1.0 / (1.0 + jnp.exp(-h)))            # SiLU
    g2, be2, m2, v2 = model.bn2
    emb = (h - m2) * lax.rsqrt(v2 + _BN_EPS) * g2 + be2
    arc = model.arcface
    out = _arc_reference(emb, arc.weight, label, s=arc.s, cos_m=arc.cos_m,
                         sin_m=arc.sin_m, th=arc.th, mm=arc.mm,
                         easy_margin=arc.easy_margin, ls_eps=arc.ls_eps,
                         C=arc.out_features)
    return emb, out


if __name__ == "__main__":
    # Small config consistent with the module: two mapped features -> concat
    # input_dim=64; the body ends in the hard-coded BatchNorm1d(1024) so
    # hidden_dim = embedding_size = 1024; ArcFace head with 128 classes,
    # s=30.0, m=0.3, ls_eps=0.0.
    config = {
        "model": {
            "features_mapping": {"feat_a": (16, 32), "feat_b": (8, 32)},
            "concat_features": ["feat_a", "feat_b"],
            "input_dim": 64,
            "hidden_dim": 1024,
            "embedding_size": 1024,
            "num_classes": 128,
        },
    }
    B = 8

    key = jax.random.PRNGKey(0)
    k_model, k_a, k_b, k_l = jax.random.split(key, 4)
    batch = {
        "feat_a": jax.random.normal(k_a, (B, 16), jnp.float32),
        "feat_b": jax.random.normal(k_b, (B, 8), jnp.float32),
    }
    label = jax.random.randint(k_l, (B,), 0, config["model"]["num_classes"], jnp.int32)

    model = MLPPallas(config, key=k_model)

    emb, out = model(batch, targets=label)
    jax.block_until_ready((emb, out))

    assert emb.shape == (B, config["model"]["hidden_dim"])
    assert out.shape == (B, config["model"]["num_classes"])
    assert bool(jnp.all(jnp.isfinite(emb)))
    assert bool(jnp.all(jnp.isfinite(out)))

    ref_emb, ref_out = _mlp_reference(model, batch, label)
    emb_err = float(jnp.max(jnp.abs(emb - ref_emb)))
    out_err = float(jnp.max(jnp.abs(out - ref_out)))
    assert emb_err < 1e-2, f"emb mismatch: {emb_err}"
    # bf16 MXU operands in the ArcFace head -> loose tolerance (~4e-3 * s=30).
    assert out_err < 0.5, f"arcface mismatch: {out_err}"

    # embedding-only path (targets=None) matches the spec's return signature.
    emb_only = model(batch)
    jax.block_until_ready(emb_only)
    assert emb_only.shape == (B, config["model"]["hidden_dim"])

    print("KERNEL_OK")
</pallas_src>

<mosaic_0001>
module attributes {stable_mosaic.version = 11 : i64} {
  func.func @_affine_proj_kernel(%arg0: i32, %arg1: memref<8x128xf32, #tpu.memory_space<vmem>>, %arg2: memref<128x128xf32, #tpu.memory_space<vmem>>, %arg3: memref<1x128xf32, #tpu.memory_space<vmem>>, %arg4: memref<8x128xf32, #tpu.memory_space<vmem>>) attributes {dimension_semantics = [#tpu.dimension_semantics<parallel>], iteration_bounds = array<i64: 1>, scalar_prefetch = 0 : i64, scratch_operands = 0 : i64, tpu.core_type = #tpu.core_type<tc>, window_params = [{pipeline_mode = #tpu.pipeline_mode<synchronous>, transform_indices = @transform_0, window_bounds = array<i64: 8, 128>}, {transform_indices = @transform_1, window_bounds = array<i64: 128, 128>}, {transform_indices = @transform_2, window_bounds = array<i64: 1, 128>}, {transform_indices = @transform_3, window_bounds = array<i64: 8, 128>}]} {
    %c0 = arith.constant 0 : index
    %c0_0 = arith.constant 0 : index
    %0 = vector.load %arg1[%c0, %c0_0] : memref<8x128xf32, #tpu.memory_space<vmem>>, vector<8x128xf32>
    %c0_1 = arith.constant 0 : index
    %c0_2 = arith.constant 0 : index
    %1 = vector.load %arg2[%c0_1, %c0_2] : memref<128x128xf32, #tpu.memory_space<vmem>>, vector<128x128xf32>
    %cst = arith.constant dense<0.000000e+00> : vector<8x128xf32>
    %2 = tpu.matmul %0, %1, %cst {dimension_numbers = #tpu.dot_dimension_numbers<[1], [1], [0], [0], [0, 0, 1, 0], [], []>} : vector<8x128xf32>, vector<128x128xf32>, vector<8x128xf32> -> vector<8x128xf32>
    %c0_3 = arith.constant 0 : index
    %c0_4 = arith.constant 0 : index
    %3 = vector.load %arg3[%c0_3, %c0_4] : memref<1x128xf32, #tpu.memory_space<vmem>>, vector<1x128xf32>
    %4 = vector.broadcast %3 : vector<1x128xf32> to vector<8x128xf32>
    %5 = arith.addf %2, %4 : vector<8x128xf32>
    %c0_5 = arith.constant 0 : index
    %c0_6 = arith.constant 0 : index
    %6 = vector.load %arg4[%c0_5, %c0_6] : memref<8x128xf32, #tpu.memory_space<vmem>>, vector<8x128xf32>
    tpu.vector_store %arg4[%c0_5, %c0_6], %5 {strides = array<i32>} : memref<8x128xf32, #tpu.memory_space<vmem>>, vector<8x128xf32>,
    return
  }
  func.func @transform_0(%arg0: i32) -> (i32, i32) {
    %c0_i32 = arith.constant 0 : i32
    %c0_i32_0 = arith.constant 0 : i32
    %c0_i32_1 = arith.constant 0 : i32
    return %c0_i32, %c0_i32_0 : i32, i32
  }
  func.func @transform_1(%arg0: i32) -> (i32, i32) {
    %c0_i32 = arith.constant 0 : i32
    %c0_i32_0 = arith.constant 0 : i32
    return %arg0, %c0_i32 : i32, i32
  }
  func.func @transform_2(%arg0: i32) -> (i32, i32) {
    %c0_i32 = arith.constant 0 : i32
    %c0_i32_0 = arith.constant 0 : i32
    return %c0_i32, %arg0 : i32, i32
  }
  func.func @transform_3(%arg0: i32) -> (i32, i32) {
    %c0_i32 = arith.constant 0 : i32
    %c0_i32_0 = arith.constant 0 : i32
    return %c0_i32, %arg0 : i32, i32
  }
}

</mosaic_0001>

<llo_original>
// kernel: tpu_custom_call.1
$region0: #{tpu_custom_call.1}
  #allocation0 [shape = 'u32[]', space=smem, size = 0x4, offset = 0x4, fixed_abs, tag = 'smem constant byte address 0x4 - core index']
  #allocation1 [shape = 'u32[72,128]{1,0:T(1,128)}', space=vmem, size = 0x9000, scoped, tag = 'internal scratch']
  %s0 = inlined_call_operand.hbm [shape: f32[8,128], index: 0, kind: input, shape index: {}]
  %s1 = inlined_call_operand.hbm [shape: f32[128,128], index: 1, kind: input, shape index: {}]
  %s2 = inlined_call_operand.vmem [shape: f32[1,128], index: 2, kind: input, shape index: {}]
  %s3 = inlined_call_operand.hbm [shape: f32[8,128], index: 3, kind: output, shape index: {}]
  %s4 = sld [smem:[#allocation0]]
  $region30: #{tpu_custom_call.1} parent=0
    _
  %s6 = ssub.s32 1, %s4
  %s7 = scalar_select 0, %s6, %s4
  $region1: #{tpu_custom_call.1} parent=0
    #allocation2 [shape = 'u8[4096]{0}', space=vmem, size = 0x1000, scoped, tag = 'input window, operand 0, single buffered']
    #allocation3 [shape = 's32[1]{0}', space=sflag, size = 0x4, scoped, tag = 'scoped memory for tpu_custom_call.1']
    #allocation4 [shape = 's32[1]{0}', space=sflag, size = 0x4, scoped, tag = 'scoped memory for tpu_custom_call.1']
    #allocation5 [shape = 'u8[65536]{0}', space=vmem, size = 0x10000, scoped, tag = 'input window, operand 1, single buffered']
    #allocation6 [shape = 's32[1]{0}', space=sflag, size = 0x4, scoped, tag = 'scoped memory for tpu_custom_call.1']
    #allocation7 [shape = 'u8[4096]{0}', space=vmem, size = 0x1000, scoped, tag = 'output window, operand 0, single buffered']
    %8 = vsyncpa [#allocation3], 0
    %9 = vsyncpa [#allocation6], 0
    %10 = vsyncpa [#allocation4], 0
    // Predicated region
    $region2: #{tpu_custom_call.1} parent=1 // pred_check
      _
    $region3: #{tpu_custom_call.1} parent=1 // pred_check_branch
      %12 = sbr.rel (0) target = $region5
    $region4: #{tpu_custom_call.1} parent=1 // pred_region
      %14 = vsyncadd [#allocation3], 0
      %s16 = sshll.u32 %s0, 4
      %s17 = int_to_ptr.hbm [resolvable:$true] %s16
      %s18 = sshll.u32 [#allocation2], 4
      %s19 = int_to_ptr.vmem [resolvable:$true] %s18
      %21 = dma.hbm_to_vmem [thread:$0]  %s17, 128, %s19, [#allocation3]
    $region5: #{tpu_custom_call.1} parent=1 // pred_fallthru
      _
    // Predicated region
    $region6: #{tpu_custom_call.1} parent=1 // pred_check
      _
    $region7: #{tpu_custom_call.1} parent=1 // pred_check_branch
      %23 = sbr.rel (0) target = $region9
    $region8: #{tpu_custom_call.1} parent=1 // pred_region
      %25 = vsyncadd [#allocation6], 0
      %s26 = sshll.u32 %s1, 4
      %s27 = int_to_ptr.hbm [resolvable:$true] %s26
      %s28 = sshll.u32 [#allocation5], 4
      %s29 = int_to_ptr.vmem [resolvable:$true] %s28
      %34 = dma.hbm_to_vmem [thread:$0]  %s27, 2048, %s29, [#allocation6], 128, 128, 8
    $region9: #{tpu_custom_call.1} parent=1 // pred_fallthru
      _
    // Predicated region
    $region10: #{tpu_custom_call.1} parent=1 // pred_check
      _
    $region11: #{tpu_custom_call.1} parent=1 // pred_check_branch
      %36 = sbr.rel (0) target = $region13
    $region12: #{tpu_custom_call.1} parent=1 // pred_region
      _
    $region13: #{tpu_custom_call.1} parent=1 // pred_fallthru
      _
    // Predicated region
    $region14: #{tpu_custom_call.1} parent=1 // pred_check
      _
    $region15: #{tpu_custom_call.1} parent=1 // pred_check_branch
      %38 = sbr.rel (0) target = $region17
    $region16: #{tpu_custom_call.1} parent=1 // pred_region
      %40 = dma.done [#allocation3], 128
    $region17: #{tpu_custom_call.1} parent=1 // pred_fallthru
      _
    // Predicated region
    $region18: #{tpu_custom_call.1} parent=1 // pred_check
      _
    $region19: #{tpu_custom_call.1} parent=1 // pred_check_branch
      %42 = sbr.rel (0) target = $region21
    $region20: #{tpu_custom_call.1} parent=1 // pred_region
      %44 = dma.done [#allocation6], 2048
    $region21: #{tpu_custom_call.1} parent=1 // pred_fallthru
      _
    %v45 = vld [vmem:[#allocation2] sm:$0xff]
    %v46 = vld [vmem:[#allocation5] sm:$0xff]
    %v47 = vld [vmem:[#allocation5 + $0x8] sm:$0xff]
    %v48 = vld [vmem:[#allocation5 + $0x10] sm:$0xff]
    %v49 = vld [vmem:[#allocation5 + $0x18] sm:$0xff]
    %v50 = vld [vmem:[#allocation5 + $0x20] sm:$0xff]
    %v51 = vld [vmem:[#allocation5 + $0x28] sm:$0xff]
    %v52 = vld [vmem:[#allocation5 + $0x30] sm:$0xff]
    %v53 = vld [vmem:[#allocation5 + $0x38] sm:$0xff]
    %v54 = vld [vmem:[#allocation5 + $0x40] sm:$0xff]
    %v55 = vld [vmem:[#allocation5 + $0x48] sm:$0xff]
    %v56 = vld [vmem:[#allocation5 + $0x50] sm:$0xff]
    %v57 = vld [vmem:[#allocation5 + $0x58] sm:$0xff]
    %v58 = vld [vmem:[#allocation5 + $0x60] sm:$0xff]
    %v59 = vld [vmem:[#allocation5 + $0x68] sm:$0xff]
    %v60 = vld [vmem:[#allocation5 + $0x70] sm:$0xff]
    %v61 = vld [vmem:[#allocation5 + $0x78] sm:$0xff]
    %v62 = vld [vmem:[%s2] sm:$0x1]
    %v64 = vperm.slane %v62, 0
    %66 = vmatpush.xpose.msra.mxu0 %v61
    %67 = vmatpush.xpose.msra.mxu0 %v60
    %68 = vmatpush.xpose.msra.mxu0 %v59
    %69 = vmatpush.xpose.msra.mxu0 %v58
    %70 = vmatpush.xpose.msra.mxu0 %v57
    %71 = vmatpush.xpose.msra.mxu0 %v56
    %72 = vmatpush.xpose.msra.mxu0 %v55
    %73 = vmatpush.xpose.msra.mxu0 %v54
    %74 = vmatpush.xpose.msra.mxu0 %v53
    %75 = vmatpush.xpose.msra.mxu0 %v52
    %76 = vmatpush.xpose.msra.mxu0 %v51
    %77 = vmatpush.xpose.msra.mxu0 %v50
    %78 = vmatpush.xpose.msra.mxu0 %v49
    %79 = vmatpush.xpose.msra.mxu0 %v48
    %80 = vmatpush.xpose.msra.mxu0 %v47
    %81 = vmatpush.xpose.msra.mxu0 %v46
    %82 = vmatmul.f32.gmra.mxu0 %v45
    %v83 = vpop.f32.mrf.mxu0
    %v84 = vadd.f32 %v64, %v83
    %85 = vdwg.mxu0
    %86 = vst [vmem:[#allocation7] sm:$0xff] %v84
    // Predicated region
    $region22: #{tpu_custom_call.1} parent=1 // pred_check
      _
    $region23: #{tpu_custom_call.1} parent=1 // pred_check_branch
      %88 = sbr.rel (0) target = $region25
    $region24: #{tpu_custom_call.1} parent=1 // pred_region
      %90 = vsyncadd [#allocation4], 0
      %s92 = sshll.u32 [#allocation7], 4
      %s93 = int_to_ptr.vmem [resolvable:$true] %s92
      %s94 = sshll.u32 %s3, 4
      %s95 = int_to_ptr.hbm [resolvable:$true] %s94
      %97 = dma.vmem_to_hbm [thread:$0]  %s93, 128, %s95, [#allocation4]
    $region25: #{tpu_custom_call.1} parent=1 // pred_fallthru
      _
    // Predicated region
    $region26: #{tpu_custom_call.1} parent=1 // pred_check
      _
    $region27: #{tpu_custom_call.1} parent=1 // pred_check_branch
      %99 = sbr.rel (0) target = $region29
    $region28: #{tpu_custom_call.1} parent=1 // pred_region
      %101 = dma.done [#allocation4], 128
    $region29: #{tpu_custom_call.1} parent=1 // pred_fallthru
      _
    %102 = vsyncpa [#allocation3], 1
    %103 = vsyncpa [#allocation6], 1
    %104 = vsyncpa [#allocation4], 1

</llo_original>
